<compile_context>
chip_gen: v7x
topology: tpu7x:2x2x1
jax: 0.10.0
libtpu: 0.0.40
codegen_flags: <defaults>
</compile_context>

<pallas_src>
import functools

import jax
import jax.numpy as jnp
from jax.experimental import pallas as pl
from jax.experimental.pallas import tpu as pltpu


_VMEM_LIMIT_BYTES = 32 * 1024 * 1024    # scoped VMEM request; safe on v5e/v6e/v7x
_INPUT_VMEM_BUDGET = 16 * 1024 * 1024   # budget for the double-buffered input tile


def _risk_measure_kernel(y_ref, o_ref, *, lambdaa, inv_w, inv_wm1):
    """One tile: (TM, W) rows -> (TM, 1) of mean + lambdaa * unbiased std."""
    y = y_ref[...].astype(jnp.float32)                # accumulate in f32
    mean = jnp.sum(y, axis=1, keepdims=True) * inv_w  # (TM, 1)
    d = y - mean                                      # centered (two-pass, robust)
    var = jnp.sum(d * d, axis=1, keepdims=True) * inv_wm1
    o_ref[...] = (mean + lambdaa * jnp.sqrt(var)).astype(o_ref.dtype)


def _round_up(x: int, m: int) -> int:
    return -(-x // m) * m


def _choose_tile_m(n: int, w: int, itemsize: int) -> int:
    """Largest row tile whose double-buffered input block fits the VMEM budget."""
    max_rows_by_vmem = max(8, _INPUT_VMEM_BUDGET // (2 * w * itemsize))
    tile = min(1024, max_rows_by_vmem)
    # Keep the single "parallel" grid axis >= 2 steps when N allows it, so it
    # can shard across v7x's two TensorCores.
    if n > 16:
        tile = min(tile, _round_up(_round_up(n, 2) // 2, 8))
    tile = min(tile, _round_up(n, 8))   # don't pad a tiny N up to a huge tile
    return max(8, (tile // 8) * 8)


def risk_measure_util(Y: jax.Array, lambdaa: float = 0.5) -> jax.Array:
    """mean(Y, axis=1) + lambdaa * std(Y, axis=1, ddof=1);  Y: (N, W) -> (N,)."""
    N, W = Y.shape
    tile_m = _choose_tile_m(N, W, Y.dtype.itemsize)

    # TODO(synk): for very large W (where a single (tile_m, W) block no longer
    # fits the VMEM budget) add a second "arbitrary" grid axis over W with f32
    # scratch accumulators and pl.when init/finalize, instead of shrinking tile_m.

    grid_m = pl.cdiv(N, tile_m)
    n_pad = grid_m * tile_m
    if n_pad != N:
        # Zero-padded rows only affect their own (discarded) outputs.
        Y = jnp.pad(Y, ((0, n_pad - N), (0, 0)))

    inv_w = 1.0 / W
    inv_wm1 = 1.0 / (W - 1) if W > 1 else float("nan")  # torch.std is NaN for W == 1

    kernel = functools.partial(
        _risk_measure_kernel,
        lambdaa=float(lambdaa),
        inv_w=float(inv_w),
        inv_wm1=float(inv_wm1),
    )

    out2d = pl.pallas_call(
        kernel,
        out_shape=jax.ShapeDtypeStruct((n_pad, 1), Y.dtype),
        grid_spec=pltpu.PrefetchScalarGridSpec(
            num_scalar_prefetch=0,
            grid=(grid_m,),
            in_specs=[pl.BlockSpec((tile_m, W), lambda i: (i, 0))],
            out_specs=pl.BlockSpec((tile_m, 1), lambda i: (i, 0)),
        ),
        compiler_params=pltpu.CompilerParams(
            dimension_semantics=("parallel",),
            vmem_limit_bytes=_VMEM_LIMIT_BYTES,
        ),
    )(Y)
    return out2d[:N, 0]


def _reference(Y, lambdaa=0.5):
    mean = jnp.mean(Y, axis=1)
    std = jnp.std(Y, axis=1, ddof=1)   # torch.std default: unbiased
    return mean + lambdaa * std


if __name__ == "__main__":
    key = jax.random.PRNGKey(0)
    k1, k2 = jax.random.split(key)

    # Case 1: small, exactly-tiled shape (batch of 8 utility rows, 128 samples).
    Y1 = jax.random.normal(k1, (8, 128), dtype=jnp.float32)
    out1 = jax.block_until_ready(risk_measure_util(Y1, lambdaa=0.5))
    ref1 = _reference(Y1, lambdaa=0.5)
    assert out1.shape == (8,)
    assert jnp.allclose(out1, ref1, atol=1e-4, rtol=1e-4), (out1, ref1)

    # Case 2: non-multiple N (exercises padding + 2-step parallel grid) with a
    # non-zero mean offset (exercises the centered-variance path).
    Y2 = jax.random.normal(k2, (300, 64), dtype=jnp.float32) + 3.0
    out2 = jax.block_until_ready(risk_measure_util(Y2, lambdaa=0.5))
    ref2 = _reference(Y2, lambdaa=0.5)
    assert out2.shape == (300,)
    assert jnp.allclose(out2, ref2, atol=1e-4, rtol=1e-4), (out2, ref2)

    print("KERNEL_OK")
</pallas_src>

<mosaic_0001>
module attributes {stable_mosaic.version = 11 : i64} {
  func.func @_risk_measure_kernel(%arg0: i32, %arg1: memref<8x128xf32, #tpu.memory_space<vmem>>, %arg2: memref<8x1xf32, #tpu.memory_space<vmem>>) attributes {dimension_semantics = [#tpu.dimension_semantics<parallel>], iteration_bounds = array<i64: 1>, scalar_prefetch = 0 : i64, scratch_operands = 0 : i64, tpu.core_type = #tpu.core_type<tc>, window_params = [{transform_indices = @transform_0, window_bounds = array<i64: 8, 128>}, {transform_indices = @transform_1, window_bounds = array<i64: 8, 1>}]} {
    %c0 = arith.constant 0 : index
    %c0_0 = arith.constant 0 : index
    %0 = vector.load %arg1[%c0, %c0_0] : memref<8x128xf32, #tpu.memory_space<vmem>>, vector<8x128xf32>
    %cst = arith.constant dense<0.000000e+00> : vector<8xf32>
    %1 = vector.multi_reduction <add>, %0, %cst [1] : vector<8x128xf32> to vector<8xf32>
    %2 = vector.shape_cast %1 : vector<8xf32> to vector<8x1xf32>
    %cst_1 = arith.constant 7.812500e-03 : f32
    %3 = vector.broadcast %cst_1 : f32 to vector<8x1xf32>
    %4 = arith.mulf %2, %3 : vector<8x1xf32>
    %5 = vector.broadcast %4 : vector<8x1xf32> to vector<8x128xf32>
    %6 = arith.subf %0, %5 : vector<8x128xf32>
    %7 = arith.mulf %6, %6 : vector<8x128xf32>
    %cst_2 = arith.constant dense<0.000000e+00> : vector<8xf32>
    %8 = vector.multi_reduction <add>, %7, %cst_2 [1] : vector<8x128xf32> to vector<8xf32>
    %9 = vector.shape_cast %8 : vector<8xf32> to vector<8x1xf32>
    %cst_3 = arith.constant 0.00787401571 : f32
    %10 = vector.broadcast %cst_3 : f32 to vector<8x1xf32>
    %11 = arith.mulf %9, %10 : vector<8x1xf32>
    %12 = math.sqrt %11 : vector<8x1xf32>
    %cst_4 = arith.constant 5.000000e-01 : f32
    %13 = vector.broadcast %cst_4 : f32 to vector<8x1xf32>
    %14 = arith.mulf %13, %12 : vector<8x1xf32>
    %15 = arith.addf %4, %14 : vector<8x1xf32>
    %c0_5 = arith.constant 0 : index
    %c0_6 = arith.constant 0 : index
    %16 = vector.load %arg2[%c0_5, %c0_6] : memref<8x1xf32, #tpu.memory_space<vmem>>, vector<8x1xf32>
    tpu.vector_store %arg2[%c0_5, %c0_6], %15 {strides = array<i32>} : memref<8x1xf32, #tpu.memory_space<vmem>>, vector<8x1xf32>,
    return
  }
  func.func @transform_0(%arg0: i32) -> (i32, i32) {
    %c0_i32 = arith.constant 0 : i32
    %c0_i32_0 = arith.constant 0 : i32
    return %arg0, %c0_i32 : i32, i32
  }
  func.func @transform_1(%arg0: i32) -> (i32, i32) {
    %c0_i32 = arith.constant 0 : i32
    %c0_i32_0 = arith.constant 0 : i32
    return %arg0, %c0_i32 : i32, i32
  }
}

</mosaic_0001>

<llo_original>
// kernel: tpu_custom_call.1
$region0: #{tpu_custom_call.1}
  #allocation0 [shape = 'u32[]', space=smem, size = 0x4, offset = 0x4, fixed_abs, tag = 'smem constant byte address 0x4 - core index']
  #allocation1 [shape = 'u32[144,128]{1,0:T(1,128)}', space=vmem, size = 0x12000, scoped, tag = 'internal scratch']
  %s0 = inlined_call_operand.hbm [shape: f32[8,128], index: 0, kind: input, shape index: {}]
  %s1 = inlined_call_operand.vmem [shape: f32[8,1], index: 1, kind: output, shape index: {}]
  %s2 = sld [smem:[#allocation0]]
  $region18: #{tpu_custom_call.1} parent=0
    _
  %s4 = ssub.s32 1, %s2
  %s5 = scalar_select 0, %s4, %s2
  $region1: #{tpu_custom_call.1} parent=0
    #allocation2 [shape = 'u8[4096]{0}', space=vmem, size = 0x1000, scoped, tag = 'input window, operand 0, single buffered']
    #allocation3 [shape = 's32[1]{0}', space=sflag, size = 0x4, scoped, tag = 'scoped memory for tpu_custom_call.1']
    %6 = vsyncpa [#allocation3], 0
    // Predicated region
    $region2: #{tpu_custom_call.1} parent=1 // pred_check
      _
    $region3: #{tpu_custom_call.1} parent=1 // pred_check_branch
      %8 = sbr.rel (0) target = $region5
    $region4: #{tpu_custom_call.1} parent=1 // pred_region
      %s10 = ssub.s32 128, 128
      %11 = vsyncadd [#allocation3], %s10
      %s13 = sshll.u32 [#allocation2], 4
      %s14 = int_to_ptr.vmem [resolvable:$true] %s13
      %16 = dma.hbm_to_vmem [thread:$0]  %s0, 128, %s14, [#allocation3]
    $region5: #{tpu_custom_call.1} parent=1 // pred_fallthru
      _
    // Predicated region
    $region6: #{tpu_custom_call.1} parent=1 // pred_check
      _
    $region7: #{tpu_custom_call.1} parent=1 // pred_check_branch
      %18 = sbr.rel (0) target = $region9
    $region8: #{tpu_custom_call.1} parent=1 // pred_region
      %19 = dma.done [#allocation3], 128
    $region9: #{tpu_custom_call.1} parent=1 // pred_fallthru
      _
    %v20 = vld [vmem:[#allocation2] sm:$0xff]
    %21 = vadd.xlane.f32.xlu0 %v20
    %v22 = vpop.xlane.xlu0 %21
    %v23 = vmul.f32 %v22, 0.0078125
    %v24 = vsub.f32 %v20, %v23
    %v25 = vmul.f32 %v24, %v24
    %26 = vadd.xlane.f32.xlu0 %v25
    %v27 = vpop.xlane.xlu0 %26
    %v28 = vmul.f32 %v27, 0.007874016
    %v29 = vrsqrt.pop %v28
    %v30 = vmul.f32 %v28, %v29
    %vm31 = vcmp.eq.f32.partialorder %v28, inf
    %v32 = vsel %vm31, %v28, %v30
    %vm33 = vcmp.eq.f32.partialorder %v28, 0.0
    %v34 = vand.u32 %v28, 2147483648
    %v35 = vsel %vm33, %v34, %v32
    %v36 = vmul.f32 %v35, 0.5
    %v37 = vadd.f32 %v23, %v36
    %vm38 = vcmask 7168
    %39 = vst.msk [vmem:[%s1] sm:$0xff] %vm38, %v37
    // Predicated region
    $region10: #{tpu_custom_call.1} parent=1 // pred_check
      _
    $region11: #{tpu_custom_call.1} parent=1 // pred_check_branch
      %41 = sbr.rel (0) target = $region13
    $region12: #{tpu_custom_call.1} parent=1 // pred_region
      _
    $region13: #{tpu_custom_call.1} parent=1 // pred_fallthru
      _
    // Predicated region
    $region14: #{tpu_custom_call.1} parent=1 // pred_check
      _
    $region15: #{tpu_custom_call.1} parent=1 // pred_check_branch
      %43 = sbr.rel (0) target = $region17
    $region16: #{tpu_custom_call.1} parent=1 // pred_region
      _
    $region17: #{tpu_custom_call.1} parent=1 // pred_fallthru
      _
    %44 = vsyncpa [#allocation3], 1

</llo_original>
